<compile_context>
chip_gen: v6e
topology: v6e:2x2x1
jax: 0.10.0
libtpu: 0.0.40
codegen_flags: <defaults>
</compile_context>

<pallas_src>
import jax
import jax.numpy as jnp
from jax.experimental import pallas as pl
from jax.experimental.pallas import tpu as pltpu


def _round_up(n, m):
    return ((n + m - 1) // m) * m


def mlp_kernel(xT_ref, w1_ref, b1_ref, w2_ref, b2_ref, o_ref):
    # Hidden layer on the MXU: (32, 9) @ (9, TB) -> (32, TB), f32 accumulation.
    h = jnp.dot(w1_ref[...], xT_ref[...], preferred_element_type=jnp.float32)
    # Bias + sigmoid (EUP slot) in f32; b1 is (32, 1) and broadcasts across batch lanes.
    h = jax.nn.sigmoid(h + b1_ref[...])
    # Output layer has N=1: VPU multiply + sublane (XLU) reduce against w2 (32, 1) gives
    # a lane-dense (1, TB) result row.  b2 is a scalar read from SMEM.
    out = jnp.sum(h * w2_ref[...], axis=0, keepdims=True) + b2_ref[0, 0]
    o_ref[...] = out.astype(o_ref.dtype)


def my_model_forward(x, w1, b1, w2, b2, *, block_rows=32768, input_dtype=None):
    """Fused Linear(9,32) -> Sigmoid -> Linear(32,1).

    x:  (B, 9)  f32   (PyTorch activation layout; transposed once here -> lane-dense)
    w1: (32, 9) f32   (PyTorch Linear weight, native (out, in) layout)
    b1: (32,)   f32
    w2: (1, 32) f32   (PyTorch Linear weight, native layout)
    b2: (1,)    f32
    input_dtype: optionally jnp.bfloat16 to halve x/w1 HBM traffic (f32 accumulation).
    """
    B, in_dim = x.shape
    hidden = w1.shape[0]

    # One-time XLA transpose so the batch maps onto the lane axis inside the kernel.
    # (If the producer can supply x already as (9, B), pass it through and skip this.)
    xT = x.T
    b1c = b1.reshape(hidden, 1)
    w2c = w2.reshape(1, hidden).T          # (32, 1): sublane-reduce operand
    b2c = b2.reshape(1, 1)

    if input_dtype is not None:
        xT = xT.astype(input_dtype)
        w1 = w1.astype(input_dtype)

    # Batch tile: a single full-array block for small B; otherwise a multiple of 128
    # lanes, capped at block_rows, sized for >= 2 grid steps (feeds both v7x TCs).
    if B <= 256:
        TB = B
    else:
        TB = max(128, min(block_rows, _round_up(pl.cdiv(B, 2), 128)))
    grid = (pl.cdiv(B, TB),)

    # VMEM budget: double-buffered xT (9 -> 16 sublanes) and out (1 -> 8 sublanes)
    # tiles plus the (32, TB) hidden activation / sigmoid temporaries, clamped against
    # this generation's physical per-core VMEM.
    bytes_per_row = 4 * (2 * 16 + 2 * 8 + 2 * 32)      # ~512 B of f32 working set / row
    need = TB * bytes_per_row + (2 << 20)               # + weights / misc headroom
    try:
        vmem_cap = pltpu.get_tpu_info().vmem_capacity_bytes
    except Exception:
        vmem_cap = 64 * 1024 * 1024                     # conservative (v7x per-core)
    vmem_limit = min(int(vmem_cap * 0.75), max(need, 4 << 20))

    out = pl.pallas_call(
        mlp_kernel,
        out_shape=jax.ShapeDtypeStruct((1, B), jnp.float32),
        grid=grid,
        in_specs=[
            pl.BlockSpec((in_dim, TB), lambda i: (0, i)),       # xT: streamed, lane-dense
            pl.BlockSpec((hidden, in_dim), lambda i: (0, 0)),   # w1: VMEM-resident
            pl.BlockSpec((hidden, 1), lambda i: (0, 0)),        # b1: VMEM-resident
            pl.BlockSpec((hidden, 1), lambda i: (0, 0)),        # w2: VMEM-resident
            pl.BlockSpec(memory_space=pltpu.MemorySpace.SMEM),  # b2: scalar in SMEM
        ],
        out_specs=pl.BlockSpec((1, TB), lambda i: (0, i)),      # lane-dense output row
        compiler_params=pltpu.CompilerParams(
            dimension_semantics=("parallel",),   # batch tiles shard across v7x's 2 TCs
            vmem_limit_bytes=vmem_limit,
        ),
    )(xT, w1, b1c, w2c, b2c)
    return out.reshape(B, 1)


if __name__ == "__main__":
    key = jax.random.PRNGKey(0)
    k_x, k_w1, k_b1, k_w2, k_b2, k_x2 = jax.random.split(key, 6)

    in_dim, hidden, out_dim = 9, 32, 1

    # PyTorch Linear stores W as (out, in); both weights are used in native layout.
    w1 = jax.random.normal(k_w1, (hidden, in_dim), dtype=jnp.float32) * 0.1
    b1 = jax.random.normal(k_b1, (hidden,), dtype=jnp.float32) * 0.1
    w2 = jax.random.normal(k_w2, (out_dim, hidden), dtype=jnp.float32) * 0.1
    b2 = jax.random.normal(k_b2, (out_dim,), dtype=jnp.float32) * 0.1

    def ref_fn(x):
        return jax.nn.sigmoid(x @ w1.T + b1) @ w2.T + b2

    ok = True

    # Case 1: tiny batch -> single full-array tile (no 128 divisibility needed).
    x_small = jax.random.normal(k_x, (8, in_dim), dtype=jnp.float32)
    out_small = jax.block_until_ready(my_model_forward(x_small, w1, b1, w2, b2))
    ok &= out_small.shape == (8, out_dim)
    ok &= bool(jnp.allclose(out_small, ref_fn(x_small), atol=1e-5, rtol=1e-5))

    # Case 2: ragged batch (300) -> two 256-lane tiles, partial last block, no jnp.pad.
    x_ragged = jax.random.normal(k_x2, (300, in_dim), dtype=jnp.float32)
    out_ragged = jax.block_until_ready(my_model_forward(x_ragged, w1, b1, w2, b2))
    ok &= out_ragged.shape == (300, out_dim)
    ok &= bool(jnp.allclose(out_ragged, ref_fn(x_ragged), atol=1e-5, rtol=1e-5))

    # Case 3: bf16 x/w1 streaming path (f32 MXU accumulation + f32 epilogue).
    out_bf16 = jax.block_until_ready(
        my_model_forward(x_ragged, w1, b1, w2, b2, input_dtype=jnp.bfloat16))
    ok &= out_bf16.shape == (300, out_dim)
    ok &= bool(jnp.allclose(out_bf16, ref_fn(x_ragged), atol=1e-2, rtol=1e-2))

    assert ok
    print("KERNEL_OK")
</pallas_src>

<mosaic_0001>
module attributes {stable_mosaic.version = 11 : i64} {
  func.func @mlp_kernel(%arg0: i32, %arg1: memref<9x8xf32, #tpu.memory_space<vmem>>, %arg2: memref<32x9xf32, #tpu.memory_space<vmem>>, %arg3: memref<32x1xf32, #tpu.memory_space<vmem>>, %arg4: memref<32x1xf32, #tpu.memory_space<vmem>>, %arg5: memref<1x1xf32, #tpu.memory_space<smem>>, %arg6: memref<1x8xf32, #tpu.memory_space<vmem>>) attributes {dimension_semantics = [#tpu.dimension_semantics<parallel>], iteration_bounds = array<i64: 1>, scalar_prefetch = 0 : i64, scratch_operands = 0 : i64, tpu.core_type = #tpu.core_type<tc>, window_params = [{transform_indices = @transform_0, window_bounds = array<i64: 9, 8>}, {pipeline_mode = #tpu.pipeline_mode<synchronous>, transform_indices = @transform_1, window_bounds = array<i64: 32, 9>}, {pipeline_mode = #tpu.pipeline_mode<synchronous>, transform_indices = @transform_2, window_bounds = array<i64: 32, 1>}, {pipeline_mode = #tpu.pipeline_mode<synchronous>, transform_indices = @transform_3, window_bounds = array<i64: 32, 1>}, {transform_indices = @transform_4, window_bounds = array<i64: 1, 1>}, {transform_indices = @transform_5, window_bounds = array<i64: 1, 8>}]} {
    %c0 = arith.constant 0 : index
    %c0_0 = arith.constant 0 : index
    %0 = vector.load %arg2[%c0, %c0_0] : memref<32x9xf32, #tpu.memory_space<vmem>>, vector<32x9xf32>
    %c0_1 = arith.constant 0 : index
    %c0_2 = arith.constant 0 : index
    %1 = vector.load %arg1[%c0_1, %c0_2] : memref<9x8xf32, #tpu.memory_space<vmem>>, vector<9x8xf32>
    %cst = arith.constant dense<0.000000e+00> : vector<32x8xf32>
    %2 = tpu.matmul %0, %1, %cst {dimension_numbers = #tpu.dot_dimension_numbers<[1], [0], [0], [1], [0, 0, 1, 1], [], []>} : vector<32x9xf32>, vector<9x8xf32>, vector<32x8xf32> -> vector<32x8xf32>
    %c0_3 = arith.constant 0 : index
    %c0_4 = arith.constant 0 : index
    %3 = vector.load %arg3[%c0_3, %c0_4] : memref<32x1xf32, #tpu.memory_space<vmem>>, vector<32x1xf32>
    %4 = vector.broadcast %3 : vector<32x1xf32> to vector<32x8xf32>
    %5 = arith.addf %2, %4 : vector<32x8xf32>
    %6 = arith.negf %5 : vector<32x8xf32>
    %7 = math.exp %6 : vector<32x8xf32>
    %cst_5 = arith.constant 1.000000e+00 : f32
    %8 = vector.broadcast %cst_5 : f32 to vector<32x8xf32>
    %9 = arith.addf %8, %7 : vector<32x8xf32>
    %10 = arith.divf %8, %9 : vector<32x8xf32>
    %c0_6 = arith.constant 0 : index
    %c0_7 = arith.constant 0 : index
    %11 = vector.load %arg4[%c0_6, %c0_7] : memref<32x1xf32, #tpu.memory_space<vmem>>, vector<32x1xf32>
    %12 = vector.broadcast %11 : vector<32x1xf32> to vector<32x8xf32>
    %13 = arith.mulf %10, %12 : vector<32x8xf32>
    %cst_8 = arith.constant dense<0.000000e+00> : vector<8xf32>
    %14 = vector.multi_reduction <add>, %13, %cst_8 [0] : vector<32x8xf32> to vector<8xf32>
    %15 = vector.shape_cast %14 : vector<8xf32> to vector<1x8xf32>
    %c0_9 = arith.constant 0 : index
    %c0_10 = arith.constant 0 : index
    %16 = memref.load %arg5[%c0_9, %c0_10] : memref<1x1xf32, #tpu.memory_space<smem>>
    %17 = vector.broadcast %16 : f32 to vector<1x8xf32>
    %18 = arith.addf %15, %17 : vector<1x8xf32>
    %c0_11 = arith.constant 0 : index
    %c0_12 = arith.constant 0 : index
    %19 = vector.load %arg6[%c0_11, %c0_12] : memref<1x8xf32, #tpu.memory_space<vmem>>, vector<1x8xf32>
    tpu.vector_store %arg6[%c0_11, %c0_12], %18 {strides = array<i32>} : memref<1x8xf32, #tpu.memory_space<vmem>>, vector<1x8xf32>,
    return
  }
  func.func @transform_0(%arg0: i32) -> (i32, i32) {
    %c0_i32 = arith.constant 0 : i32
    %c0_i32_0 = arith.constant 0 : i32
    return %c0_i32, %arg0 : i32, i32
  }
  func.func @transform_1(%arg0: i32) -> (i32, i32) {
    %c0_i32 = arith.constant 0 : i32
    %c0_i32_0 = arith.constant 0 : i32
    %c0_i32_1 = arith.constant 0 : i32
    return %c0_i32, %c0_i32_0 : i32, i32
  }
  func.func @transform_2(%arg0: i32) -> (i32, i32) {
    %c0_i32 = arith.constant 0 : i32
    %c0_i32_0 = arith.constant 0 : i32
    %c0_i32_1 = arith.constant 0 : i32
    return %c0_i32, %c0_i32_0 : i32, i32
  }
  func.func @transform_3(%arg0: i32) -> (i32, i32) {
    %c0_i32 = arith.constant 0 : i32
    %c0_i32_0 = arith.constant 0 : i32
    %c0_i32_1 = arith.constant 0 : i32
    return %c0_i32, %c0_i32_0 : i32, i32
  }
  func.func @transform_4(%arg0: i32) -> (i32, i32) {
    %c0_i32 = arith.constant 0 : i32
    %c0_i32_0 = arith.constant 0 : i32
    %c0_i32_1 = arith.constant 0 : i32
    return %c0_i32, %c0_i32_0 : i32, i32
  }
  func.func @transform_5(%arg0: i32) -> (i32, i32) {
    %c0_i32 = arith.constant 0 : i32
    %c0_i32_0 = arith.constant 0 : i32
    return %c0_i32, %arg0 : i32, i32
  }
}

</mosaic_0001>

<llo_original>
// kernel: tpu_custom_call.1
$region0: #{tpu_custom_call.1}
  #allocation0 [shape = 'u32[]', space=smem, size = 0x4, offset = 0x4, fixed_abs, tag = 'smem constant byte address 0x4 - core index']
  #allocation1 [shape = 'u32[144,128]{1,0:T(1,128)}', space=vmem, size = 0x12000, scoped, tag = 'internal scratch']
  #allocation2 [shape = 'f32[1,1]{1,0:T(1,128)S(6)}', space=smem, size = 0x200, scoped, tag = 'scoped memory for tpu_custom_call.1']
  %s0 = inlined_call_operand.vmem [shape: f32[9,8], index: 0, kind: input, shape index: {}]
  %s1 = inlined_call_operand.vmem [shape: f32[32,9], index: 1, kind: input, shape index: {}]
  %s2 = inlined_call_operand.vmem [shape: f32[32,1], index: 2, kind: input, shape index: {}]
  %s3 = inlined_call_operand.vmem [shape: f32[32,1], index: 3, kind: input, shape index: {}]
  %s4 = inlined_call_operand.<no memory space> [shape: f32[1,1], index: 4, kind: input, shape index: {}]
  %s5 = inlined_call_operand.hbm [shape: f32[1,8], index: 5, kind: output, shape index: {}]
  %s6 = sld [smem:[#allocation0]]
  $region30: #{tpu_custom_call.1} parent=0
    _
  %s8 = ssub.s32 1, %s6
  %s9 = scalar_select 0, %s8, %s6
  %10 = sst [smem:[#allocation2]] %s4
  $region1: #{tpu_custom_call.1} parent=0
    #allocation3 [shape = 'u8[512]{0}', space=vmem, size = 0x400, scoped, tag = 'output window, operand 0, single buffered']
    #allocation4 [shape = 's32[1]{0}', space=sflag, size = 0x4, scoped, tag = 'scoped memory for tpu_custom_call.1']
    %11 = vsyncpa [#allocation4], 0
    // Predicated region
    $region2: #{tpu_custom_call.1} parent=1 // pred_check
      _
    $region3: #{tpu_custom_call.1} parent=1 // pred_check_branch
      %13 = sbr.rel (0) target = $region5
    $region4: #{tpu_custom_call.1} parent=1 // pred_region
      _
    $region5: #{tpu_custom_call.1} parent=1 // pred_fallthru
      _
    // Predicated region
    $region6: #{tpu_custom_call.1} parent=1 // pred_check
      _
    $region7: #{tpu_custom_call.1} parent=1 // pred_check_branch
      %15 = sbr.rel (0) target = $region9
    $region8: #{tpu_custom_call.1} parent=1 // pred_region
      _
    $region9: #{tpu_custom_call.1} parent=1 // pred_fallthru
      _
    // Predicated region
    $region10: #{tpu_custom_call.1} parent=1 // pred_check
      _
    $region11: #{tpu_custom_call.1} parent=1 // pred_check_branch
      %17 = sbr.rel (0) target = $region13
    $region12: #{tpu_custom_call.1} parent=1 // pred_region
      _
    $region13: #{tpu_custom_call.1} parent=1 // pred_fallthru
      _
    // Predicated region
    $region14: #{tpu_custom_call.1} parent=1 // pred_check
      _
    $region15: #{tpu_custom_call.1} parent=1 // pred_check_branch
      %19 = sbr.rel (0) target = $region17
    $region16: #{tpu_custom_call.1} parent=1 // pred_region
      _
    $region17: #{tpu_custom_call.1} parent=1 // pred_fallthru
      _
    // Predicated region
    $region18: #{tpu_custom_call.1} parent=1 // pred_check
      _
    $region19: #{tpu_custom_call.1} parent=1 // pred_check_branch
      %21 = sbr.rel (0) target = $region21
    $region20: #{tpu_custom_call.1} parent=1 // pred_region
      _
    $region21: #{tpu_custom_call.1} parent=1 // pred_fallthru
      _
    %v22 = vld [vmem:[%s1] sm:$0xff]
    %v23 = vld [vmem:[%s1 + $0x8] sm:$0xff]
    %v24 = vld [vmem:[%s1 + $0x10] sm:$0xff]
    %v25 = vld [vmem:[%s1 + $0x18] sm:$0xff]
    %v26 = vld [vmem:[%s0] sm:$0xff]
    %v27 = vld [vmem:[%s0 + $0x8] sm:$0x1]
    %v28 = vld [vmem:[%s2] sm:$0xff]
    %v29 = vld [vmem:[%s2 + $0x8] sm:$0xff]
    %v30 = vld [vmem:[%s2 + $0x10] sm:$0xff]
    %v31 = vld [vmem:[%s2 + $0x18] sm:$0xff]
    %33 = vset.pattern.permute.xlu0 0
    %34 = vperm.xlu0 %33, %v28
    %v35 = vpop.permute.xlu0 %34
    %38 = vset.pattern.permute.xlu0 0
    %39 = vperm.xlu0 %38, %v29
    %v40 = vpop.permute.xlu0 %39
    %43 = vset.pattern.permute.xlu0 0
    %44 = vperm.xlu0 %43, %v30
    %v45 = vpop.permute.xlu0 %44
    %48 = vset.pattern.permute.xlu0 0
    %49 = vperm.xlu0 %48, %v31
    %v50 = vpop.permute.xlu0 %49
    %vm52 = vcmask 72704
    %v54 = vsel %vm52, %v22, 0
    %v57 = vsel %vm52, %v23, 0
    %v60 = vsel %vm52, %v24, 0
    %v63 = vsel %vm52, %v25, 0
    %vm65 = vcmask 1040384
    %v67 = vsel %vm65, %v27, 0
    %69 = vmatprep.subr.mxu0 0.0
    %70 = vmatpush1.msra.mxu0 0.0
    %71 = vmatprep.subr.mxu0 0.0
    %72 = vmatpush1.msra.mxu0 0.0
    %73 = vmatprep.subr.mxu0 0.0
    %74 = vmatpush1.msra.mxu0 0.0
    %75 = vmatprep.subr.mxu0 0.0
    %76 = vmatpush1.msra.mxu0 0.0
    %77 = vmatprep.subr.mxu0 0.0
    %78 = vmatpush1.msra.mxu0 0.0
    %79 = vmatprep.subr.mxu0 0.0
    %80 = vmatpush1.msra.mxu0 0.0
    %81 = vmatprep.subr.mxu0 0.0
    %82 = vmatpush1.msra.mxu0 0.0
    %83 = vmatprep.subr.mxu0 0.0
    %84 = vmatpush1.msra.mxu0 0.0
    %85 = vmatprep.subr.mxu0 0.0
    %86 = vmatpush1.msra.mxu0 0.0
    %87 = vmatprep.subr.mxu0 0.0
    %88 = vmatpush1.msra.mxu0 0.0
    %89 = vmatprep.subr.mxu0 0.0
    %90 = vmatpush1.msra.mxu0 0.0
    %91 = vmatprep.subr.mxu0 0.0
    %92 = vmatpush1.msra.mxu0 0.0
    %93 = vmatprep.subr.mxu0 0.0
    %94 = vmatpush1.msra.mxu0 0.0
    %95 = vmatprep.subr.mxu0 0.0
    %96 = vmatpush1.msra.mxu0 0.0
    %97 = vmatprep.subr.mxu0 0.0
    %98 = vmatpush1.msra.mxu0 %v67
    %99 = vmatprep.subr.mxu0 0.0
    %100 = vmatpush1.msra.mxu0 %v26
    %101 = vmatprep.subr.mxu0 0.0
    %102 = vmatpush2.msra.mxu0 0.0
    %103 = vmatprep.subr.mxu0 0.0
    %104 = vmatpush2.msra.mxu0 0.0
    %105 = vmatprep.subr.mxu0 0.0
    %106 = vmatpush2.msra.mxu0 0.0
    %107 = vmatprep.subr.mxu0 0.0
    %108 = vmatpush2.msra.mxu0 0.0
    %109 = vmatprep.subr.mxu0 0.0
    %110 = vmatpush2.msra.mxu0 0.0
    %111 = vmatprep.subr.mxu0 0.0
    %112 = vmatpush2.msra.mxu0 0.0
    %113 = vmatprep.subr.mxu0 0.0
    %114 = vmatpush2.msra.mxu0 0.0
    %115 = vmatprep.subr.mxu0 0.0
    %116 = vmatpush2.msra.mxu0 0.0
    %117 = vmatprep.subr.mxu0 0.0
    %118 = vmatpush2.msra.mxu0 0.0
    %119 = vmatprep.subr.mxu0 0.0
    %120 = vmatpush2.msra.mxu0 0.0
    %121 = vmatprep.subr.mxu0 0.0
    %122 = vmatpush2.msra.mxu0 0.0
    %123 = vmatprep.subr.mxu0 0.0
    %124 = vmatpush2.msra.mxu0 0.0
    %125 = vmatprep.subr.mxu0 0.0
    %126 = vmatpush2.msra.mxu0 0.0
    %127 = vmatprep.subr.mxu0 0.0
    %128 = vmatpush2.msra.mxu0 0.0
    %129 = vmatprep.subr.mxu0 0.0
    %130 = vmatpush2.msra.mxu0 0.0
    %131 = vmatprep.subr.mxu0 0.0
    %132 = vmatpush2.msra.mxu0 0.0
    %133 = vmatprep.mubr.f32.mxu0 0.0
    %134 = vmatmul.mubr.f32.gmra.mxu0 %v54
    %v135 = vpop.f32.mrf.mxu0
    %v136 = vadd.f32 %v35, %v135
    %v137 = vpop.f32.mrf.mxu0
    %138 = vmatprep.mubr.f32.mxu0 0.0
    %139 = vmatmul.mubr.f32.gmra.mxu0 %v57
    %v140 = vpop.f32.mrf.mxu0
    %v141 = vadd.f32 %v40, %v140
    %v142 = vpop.f32.mrf.mxu0
    %143 = vmatprep.mubr.f32.mxu0 0.0
    %144 = vmatmul.mubr.f32.gmra.mxu0 %v60
    %v145 = vpop.f32.mrf.mxu0
    %v146 = vadd.f32 %v45, %v145
    %v147 = vpop.f32.mrf.mxu0
    %148 = vmatprep.mubr.f32.mxu0 0.0
    %149 = vmatmul.mubr.f32.gmra.mxu0 %v63
    %v150 = vpop.f32.mrf.mxu0
    %v151 = vadd.f32 %v50, %v150
    %v152 = vpop.f32.mrf.mxu0
    %153 = vdwg.mxu0
    %v154 = vxor.u32 %v136, 2147483648
    %v155 = vxor.u32 %v141, 2147483648
    %v156 = vxor.u32 %v146, 2147483648
    %v157 = vxor.u32 %v151, 2147483648
    %v158 = vmul.f32 %v154, 1.442695
    %v159 = vpow.pop %v158
    %v160 = vmul.f32 %v155, 1.442695
    %v161 = vpow.pop %v160
    %v162 = vmul.f32 %v156, 1.442695
    %v163 = vpow.pop %v162
    %v164 = vmul.f32 %v157, 1.442695
    %v165 = vpow.pop %v164
    %v166 = vadd.f32 %v159, 1.0
    %v167 = vadd.f32 %v161, 1.0
    %v168 = vadd.f32 %v163, 1.0
    %v169 = vadd.f32 %v165, 1.0
    %v170 = vrcp.pop %v166
    %v171 = vmul.f32 1.0, %v170
    %v172 = vrcp.pop %v167
    %v173 = vmul.f32 1.0, %v172
    %v174 = vrcp.pop %v168
    %v175 = vmul.f32 1.0, %v174
    %v176 = vrcp.pop %v169
    %v177 = vmul.f32 1.0, %v176
    %v178 = vld [vmem:[%s3] sm:$0xff]
    %v179 = vld [vmem:[%s3 + $0x8] sm:$0xff]
    %v180 = vld [vmem:[%s3 + $0x10] sm:$0xff]
    %v181 = vld [vmem:[%s3 + $0x18] sm:$0xff]
    %183 = vset.pattern.permute.xlu0 0
    %184 = vperm.xlu0 %183, %v178
    %v185 = vpop.permute.xlu0 %184
    %188 = vset.pattern.permute.xlu0 0
    %189 = vperm.xlu0 %188, %v179
    %v190 = vpop.permute.xlu0 %189
    %193 = vset.pattern.permute.xlu0 0
    %194 = vperm.xlu0 %193, %v180
    %v195 = vpop.permute.xlu0 %194
    %198 = vset.pattern.permute.xlu0 0
    %199 = vperm.xlu0 %198, %v181
    %v200 = vpop.permute.xlu0 %199
    %v202 = vmul.f32 %v171, %v185
    %v203 = vmul.f32 %v173, %v190
    %v204 = vmul.f32 %v175, %v195
    %v205 = vmul.f32 %v177, %v200
    %vm206 = vcmask 64512
    %v207 = vsel %vm206, %v202, 0.0
    %v208 = vsel %vm206, %v203, 0.0
    %v209 = vadd.f32 %v207, %v208
    %v210 = vsel %vm206, %v204, 0.0
    %v211 = vadd.f32 %v209, %v210
    %v212 = vsel %vm206, %v205, 0.0
    %v213 = vadd.f32 %v211, %v212
    %v214 = vrot.slane %v213, 4
    %v215 = vadd.f32 %v213, %v214
    %v216 = vrot.slane %v215, 2
    %v217 = vadd.f32 %v215, %v216
    %v218 = vrot.slane %v217, 1
    %v219 = vadd.f32 %v217, %v218
    %s220 = sld [smem:[#allocation2]]
    %v221 = vstv %s220
    %v222 = vadd.f32 %v219, %v221
    %vm223 = vcmask 57344
    %224 = vst.msk [vmem:[#allocation3] sm:$0x1] %vm223, %v222
    // Predicated region
    $region22: #{tpu_custom_call.1} parent=1 // pred_check
      _
    $region23: #{tpu_custom_call.1} parent=1 // pred_check_branch
      %226 = sbr.rel (0) target = $region25
    $region24: #{tpu_custom_call.1} parent=1 // pred_region
      %s228 = ssub.s32 16, 16
      %229 = vsyncadd [#allocation4], %s228
      %s231 = sshll.u32 [#allocation3], 4
      %s232 = int_to_ptr.vmem [resolvable:$true] %s231
      %234 = dma.vmem_to_hbm [thread:$0]  %s232, 16, %s5, [#allocation4]
    $region25: #{tpu_custom_call.1} parent=1 // pred_fallthru
      _
    // Predicated region
    $region26: #{tpu_custom_call.1} parent=1 // pred_check
      _
    $region27: #{tpu_custom_call.1} parent=1 // pred_check_branch
      %236 = sbr.rel (0) target = $region29
    $region28: #{tpu_custom_call.1} parent=1 // pred_region
      %237 = dma.done [#allocation4], 16
    $region29: #{tpu_custom_call.1} parent=1 // pred_fallthru
      _
    %238 = vsyncpa [#allocation4], 1

</llo_original>
